<compile_context>
chip_gen: v6e
topology: v6e:2x2x1
jax: 0.10.0
libtpu: 0.0.40
codegen_flags: <defaults>
</compile_context>

<pallas_src>
import functools

import jax
import jax.numpy as jnp
from jax.experimental import pallas as pl
from jax.experimental.pallas import tpu as pltpu


def _round_up(x: int, m: int) -> int:
    return ((x + m - 1) // m) * m


def _linear_relu_kernel(x_ref, w_ref, b_ref, o_ref, *scratch):
    """Grid (i, j, k): acc[i, j] += x[i, k] @ w[k, j]; bias + ReLU at k == last."""
    # If no scratch was allocated, the f32 output block itself is the accumulator
    # (its block index (i, j) is constant across the k axis -> VMEM resident).
    acc_ref = scratch[0] if scratch else o_ref
    k = pl.program_id(2)

    @pl.when(k == 0)
    def _():
        acc_ref[...] = jnp.zeros_like(acc_ref)

    # Canonical [tm, tk] x [tk, tn] matmul on the MXU with f32 accumulation.
    acc_ref[...] += jnp.dot(x_ref[...], w_ref[...],
                            preferred_element_type=jnp.float32)

    # Bias + ReLU exactly once, in the K epilogue.
    @pl.when(k == pl.num_programs(2) - 1)
    def _():
        res = acc_ref[...] + b_ref[...].astype(jnp.float32)
        o_ref[...] = jnp.maximum(res, 0.0).astype(o_ref.dtype)


@functools.partial(jax.jit,
                   static_argnames=("tm", "tn", "tk", "use_bf16_operands"))
def linear_relu(x, weight, bias, *, tm=512, tn=1024, tk=1024,
                use_bf16_operands=False):
    """x: [B, inp], weight: [out, inp] (PyTorch layout), bias: [out] -> [B, out]."""
    B, inp = x.shape
    out = weight.shape[0]
    out_dtype = x.dtype

    compute_dtype = jnp.bfloat16 if use_bf16_operands else x.dtype
    op_bytes = jnp.dtype(compute_dtype).itemsize
    out_bytes = jnp.dtype(out_dtype).itemsize
    sublane = {4: 8, 2: 16, 1: 32}.get(op_bytes, 8)

    # ---- (sublane, 128)-legal, lane-dense tiles; pad arrays to full tiles ----
    Mp = _round_up(B, sublane)
    Kp = _round_up(inp, 128)
    Np = _round_up(out, 128)
    tm = min(tm, Mp)          # multiple of `sublane` (Mp is; 512 is)
    tk = min(tk, Kp)          # multiple of 128
    tn = min(tn, Np)          # multiple of 128 -> unmasked lane-dense stores
    Mp = _round_up(Mp, tm)
    Kp = _round_up(Kp, tk)
    Np = _round_up(Np, tn)

    # v7x megacore: guarantee >= 2 blocks along a "parallel" axis when possible so
    # both TensorCores get work (halving a 256-multiple tn keeps it a 128-multiple
    # and keeps Np divisible by it). Harmless on single-TC v5e/v6e.
    if (Mp // tm) * (Np // tn) < 2 and tn >= 256 and tn % 256 == 0:
        tn //= 2

    # TODO(synk): in production, pre-transpose/pad the (static) weight once outside
    # the per-step call so unaligned shapes don't pay a full HBM pass per invocation.
    wt = weight.T                                   # [inp, out]: canonical (K, N) rhs
    xp = jnp.pad(x, ((0, Mp - B), (0, Kp - inp)))
    wp = jnp.pad(wt, ((0, Kp - inp), (0, Np - out)))
    bp = jnp.pad(bias, (0, Np - out)).reshape(1, Np).astype(jnp.float32)

    if use_bf16_operands:
        xp = xp.astype(jnp.bfloat16)
        wp = wp.astype(jnp.bfloat16)

    # f32 output -> accumulate directly into the output block, no scratch needed.
    accumulate_into_output = jnp.dtype(out_dtype) == jnp.dtype(jnp.float32)
    scratch_shapes = ([] if accumulate_into_output
                      else [pltpu.VMEM((tm, tn), jnp.float32)])

    grid = (Mp // tm, Np // tn, Kp // tk)

    # Double-buffered VMEM estimate + explicit limit (v5e's scoped default is 16 MiB).
    vmem_bytes = (2 * (tm * tk + tk * tn) * op_bytes          # x, w tiles
                  + 2 * tn * 4                                # bias tile
                  + 2 * tm * tn * out_bytes                   # output tile
                  + (0 if accumulate_into_output else tm * tn * 4))
    vmem_limit = min(max(int(vmem_bytes * 1.25) + (2 << 20), 32 << 20), 56 << 20)

    cost = pl.CostEstimate(
        flops=2 * Mp * Np * Kp,
        transcendentals=0,
        bytes_accessed=(xp.size * xp.dtype.itemsize
                        + wp.size * wp.dtype.itemsize
                        + bp.size * bp.dtype.itemsize
                        + Mp * Np * out_bytes),
    )

    yp = pl.pallas_call(
        _linear_relu_kernel,
        out_shape=jax.ShapeDtypeStruct((Mp, Np), out_dtype),
        grid_spec=pltpu.PrefetchScalarGridSpec(
            num_scalar_prefetch=0,
            grid=grid,
            in_specs=[
                pl.BlockSpec((tm, tk), lambda i, j, k: (i, k)),   # x tile   [tm, tk]
                pl.BlockSpec((tk, tn), lambda i, j, k: (k, j)),   # w tile   [tk, tn]
                pl.BlockSpec((1, tn), lambda i, j, k: (0, j)),    # bias tile [1, tn]
            ],
            out_specs=pl.BlockSpec((tm, tn), lambda i, j, k: (i, j)),
            scratch_shapes=scratch_shapes,
        ),
        compiler_params=pltpu.CompilerParams(
            dimension_semantics=("parallel", "parallel", "arbitrary"),
            vmem_limit_bytes=vmem_limit,
        ),
        cost_estimate=cost,
    )(xp, wp, bp)

    return yp[:B, :out]


if __name__ == "__main__":
    key = jax.random.PRNGKey(0)

    # --- Test 1: small shapes consistent with the module: Linear(32, 16), batch=8 ---
    B, INP, OUT = 8, 32, 16
    kx, kw, kb, k2 = jax.random.split(key, 4)
    bound = 1.0 / (INP ** 0.5)
    weight = jax.random.uniform(kw, (OUT, INP), jnp.float32, -bound, bound)
    bias = jax.random.uniform(kb, (OUT,), jnp.float32, -bound, bound)
    x = jax.random.normal(kx, (B, INP), jnp.float32)

    y = jax.block_until_ready(linear_relu(x, weight, bias))
    y_ref = jnp.maximum(x @ weight.T + bias, 0.0)
    assert y.shape == (B, OUT)
    assert jnp.allclose(y, y_ref, atol=1e-5, rtol=1e-5)

    # --- Test 2: multi-tile (N, K) grid path with K accumulation + megacore split ---
    B2, INP2, OUT2 = 128, 2048, 768          # grid = (1, 2, 2) after tn halving
    kx2, kw2, kb2, k3 = jax.random.split(k2, 4)
    bound2 = 1.0 / (INP2 ** 0.5)
    weight2 = jax.random.uniform(kw2, (OUT2, INP2), jnp.float32, -bound2, bound2)
    bias2 = jax.random.uniform(kb2, (OUT2,), jnp.float32, -bound2, bound2)
    x2 = jax.random.normal(kx2, (B2, INP2), jnp.float32)

    y2 = jax.block_until_ready(linear_relu(x2, weight2, bias2))
    y2_ref = jnp.maximum(x2 @ weight2.T + bias2, 0.0)
    assert y2.shape == (B2, OUT2)
    assert jnp.allclose(y2, y2_ref, atol=2e-4, rtol=2e-4)

    # --- Test 3: bf16-operand / f32-accumulate path (v6e / v7x MXU-friendly) ---
    B3, INP3, OUT3 = 16, 256, 256
    kx3, kw3, kb3 = jax.random.split(k3, 3)
    bound3 = 1.0 / (INP3 ** 0.5)
    weight3 = jax.random.uniform(kw3, (OUT3, INP3), jnp.float32, -bound3, bound3)
    bias3 = jax.random.uniform(kb3, (OUT3,), jnp.float32, -bound3, bound3)
    x3 = jax.random.normal(kx3, (B3, INP3), jnp.float32)

    y3 = jax.block_until_ready(linear_relu(x3, weight3, bias3,
                                           use_bf16_operands=True))
    y3_ref = jnp.maximum(x3 @ weight3.T + bias3, 0.0)
    assert y3.shape == (B3, OUT3)
    assert jnp.allclose(y3, y3_ref, atol=3e-2, rtol=3e-2)

    print("KERNEL_OK")
</pallas_src>

<mosaic_0001>
module attributes {stable_mosaic.version = 11 : i64} {
  func.func @_linear_relu_kernel(%arg0: i32, %arg1: i32, %arg2: i32, %arg3: memref<8x128xf32, #tpu.memory_space<vmem>>, %arg4: memref<128x128xf32, #tpu.memory_space<vmem>>, %arg5: memref<1x128xf32, #tpu.memory_space<vmem>>, %arg6: memref<8x128xf32, #tpu.memory_space<vmem>>) attributes {dimension_semantics = [#tpu.dimension_semantics<parallel>, #tpu.dimension_semantics<parallel>, #tpu.dimension_semantics<arbitrary>], iteration_bounds = array<i64: 1, 1, 1>, scalar_prefetch = 0 : i64, scratch_operands = 0 : i64, tpu.core_type = #tpu.core_type<tc>, window_params = [{transform_indices = @transform_0, window_bounds = array<i64: 8, 128>}, {transform_indices = @transform_1, window_bounds = array<i64: 128, 128>}, {transform_indices = @transform_2, window_bounds = array<i64: 1, 128>}, {transform_indices = @transform_3, window_bounds = array<i64: 8, 128>}]} {
    %c0_i32 = arith.constant 0 : i32
    %0 = arith.cmpi eq, %arg2, %c0_i32 : i32
    %1 = arith.extui %0 : i1 to i32
    %c0_i32_0 = arith.constant 0 : i32
    %2 = arith.cmpi ne, %1, %c0_i32_0 : i32
    scf.if %2 {
      %cst_10 = arith.constant 0.000000e+00 : f32
      %12 = vector.broadcast %cst_10 : f32 to vector<8x128xf32>
      %c0_11 = arith.constant 0 : index
      %c0_12 = arith.constant 0 : index
      %13 = vector.load %arg6[%c0_11, %c0_12] : memref<8x128xf32, #tpu.memory_space<vmem>>, vector<8x128xf32>
      tpu.vector_store %arg6[%c0_11, %c0_12], %12 {strides = array<i32>} : memref<8x128xf32, #tpu.memory_space<vmem>>, vector<8x128xf32>,
    } else {
    }
    %c0 = arith.constant 0 : index
    %c0_1 = arith.constant 0 : index
    %3 = vector.load %arg6[%c0, %c0_1] : memref<8x128xf32, #tpu.memory_space<vmem>>, vector<8x128xf32>
    %c0_2 = arith.constant 0 : index
    %c0_3 = arith.constant 0 : index
    %4 = vector.load %arg3[%c0_2, %c0_3] : memref<8x128xf32, #tpu.memory_space<vmem>>, vector<8x128xf32>
    %c0_4 = arith.constant 0 : index
    %c0_5 = arith.constant 0 : index
    %5 = vector.load %arg4[%c0_4, %c0_5] : memref<128x128xf32, #tpu.memory_space<vmem>>, vector<128x128xf32>
    %cst = arith.constant dense<0.000000e+00> : vector<8x128xf32>
    %6 = tpu.matmul %4, %5, %cst {dimension_numbers = #tpu.dot_dimension_numbers<[1], [0], [0], [1], [0, 0, 1, 1], [], []>} : vector<8x128xf32>, vector<128x128xf32>, vector<8x128xf32> -> vector<8x128xf32>
    %7 = arith.addf %3, %6 : vector<8x128xf32>
    %c0_6 = arith.constant 0 : index
    %c0_7 = arith.constant 0 : index
    %8 = vector.load %arg6[%c0_6, %c0_7] : memref<8x128xf32, #tpu.memory_space<vmem>>, vector<8x128xf32>
    tpu.vector_store %arg6[%c0_6, %c0_7], %7 {strides = array<i32>} : memref<8x128xf32, #tpu.memory_space<vmem>>, vector<8x128xf32>,
    %c0_i32_8 = arith.constant 0 : i32
    %9 = arith.cmpi eq, %arg2, %c0_i32_8 : i32
    %10 = arith.extui %9 : i1 to i32
    %c0_i32_9 = arith.constant 0 : i32
    %11 = arith.cmpi ne, %10, %c0_i32_9 : i32
    scf.if %11 {
      %c0_10 = arith.constant 0 : index
      %c0_11 = arith.constant 0 : index
      %12 = vector.load %arg6[%c0_10, %c0_11] : memref<8x128xf32, #tpu.memory_space<vmem>>, vector<8x128xf32>
      %c0_12 = arith.constant 0 : index
      %c0_13 = arith.constant 0 : index
      %13 = vector.load %arg5[%c0_12, %c0_13] : memref<1x128xf32, #tpu.memory_space<vmem>>, vector<1x128xf32>
      %14 = vector.broadcast %13 : vector<1x128xf32> to vector<8x128xf32>
      %15 = arith.addf %12, %14 : vector<8x128xf32>
      %cst_14 = arith.constant 0.000000e+00 : f32
      %16 = vector.broadcast %cst_14 : f32 to vector<8x128xf32>
      %17 = arith.maximumf %15, %16 : vector<8x128xf32>
      %c0_15 = arith.constant 0 : index
      %c0_16 = arith.constant 0 : index
      %18 = vector.load %arg6[%c0_15, %c0_16] : memref<8x128xf32, #tpu.memory_space<vmem>>, vector<8x128xf32>
      tpu.vector_store %arg6[%c0_15, %c0_16], %17 {strides = array<i32>} : memref<8x128xf32, #tpu.memory_space<vmem>>, vector<8x128xf32>,
    } else {
    }
    return
  }
  func.func @transform_0(%arg0: i32, %arg1: i32, %arg2: i32) -> (i32, i32) {
    %c0_i32 = arith.constant 0 : i32
    return %arg0, %arg2 : i32, i32
  }
  func.func @transform_1(%arg0: i32, %arg1: i32, %arg2: i32) -> (i32, i32) {
    %c0_i32 = arith.constant 0 : i32
    return %arg2, %arg1 : i32, i32
  }
  func.func @transform_2(%arg0: i32, %arg1: i32, %arg2: i32) -> (i32, i32) {
    %c0_i32 = arith.constant 0 : i32
    %c0_i32_0 = arith.constant 0 : i32
    return %c0_i32, %arg1 : i32, i32
  }
  func.func @transform_3(%arg0: i32, %arg1: i32, %arg2: i32) -> (i32, i32) {
    %c0_i32 = arith.constant 0 : i32
    return %arg0, %arg1 : i32, i32
  }
}

</mosaic_0001>

<llo_original>
// kernel: linear_relu.1
$region0: #{linear_relu.1}
  #allocation0 [shape = 'u32[]', space=smem, size = 0x4, offset = 0x4, fixed_abs, tag = 'smem constant byte address 0x4 - core index']
  #allocation1 [shape = 'u32[144,128]{1,0:T(1,128)}', space=vmem, size = 0x12000, scoped, tag = 'internal scratch']
  %s0 = inlined_call_operand.vmem [shape: f32[8,128], index: 0, kind: input, shape index: {}]
  %s1 = inlined_call_operand.vmem [shape: f32[128,128], index: 1, kind: input, shape index: {}]
  %s2 = inlined_call_operand.vmem [shape: f32[1,128], index: 2, kind: input, shape index: {}]
  %s3 = inlined_call_operand.hbm [shape: f32[8,128], index: 3, kind: output, shape index: {}]
  %s4 = sld [smem:[#allocation0]]
  $region30: #{linear_relu.1} parent=0
    _
  %s6 = ssub.s32 1, %s4
  %s7 = scalar_select 0, %s6, %s4
  $region1: #{linear_relu.1} parent=0
    #allocation2 [shape = 'u8[4096]{0}', space=vmem, size = 0x1000, scoped, tag = 'output window, operand 0, single buffered']
    #allocation3 [shape = 's32[1]{0}', space=sflag, size = 0x4, scoped, tag = 'scoped memory for linear_relu.1']
    %8 = vsyncpa [#allocation3], 0
    // Predicated region
    $region2: #{linear_relu.1} parent=1 // pred_check
      _
    $region3: #{linear_relu.1} parent=1 // pred_check_branch
      %10 = sbr.rel (0) target = $region5
    $region4: #{linear_relu.1} parent=1 // pred_region
      _
    $region5: #{linear_relu.1} parent=1 // pred_fallthru
      _
    // Predicated region
    $region6: #{linear_relu.1} parent=1 // pred_check
      _
    $region7: #{linear_relu.1} parent=1 // pred_check_branch
      %12 = sbr.rel (0) target = $region9
    $region8: #{linear_relu.1} parent=1 // pred_region
      _
    $region9: #{linear_relu.1} parent=1 // pred_fallthru
      _
    // Predicated region
    $region10: #{linear_relu.1} parent=1 // pred_check
      _
    $region11: #{linear_relu.1} parent=1 // pred_check_branch
      %14 = sbr.rel (0) target = $region13
    $region12: #{linear_relu.1} parent=1 // pred_region
      _
    $region13: #{linear_relu.1} parent=1 // pred_fallthru
      _
    %p15 = scmp.eq.s32.totalorder 0, 0
    // Predicated region
    $region14: #{linear_relu.1} parent=1 // pred_check
      %p16 = pneg %p15
    $region15: #{linear_relu.1} parent=1 // pred_check_branch
      %18 = sbr.rel (%p16) target = $region17
    $region16: #{linear_relu.1} parent=1 // pred_region
      %19 = vst [vmem:[#allocation2] sm:$0xff] 0.0
    $region17: #{linear_relu.1} parent=1 // pred_fallthru
      _
    %v20 = vld [vmem:[#allocation2] sm:$0xff]
    %v21 = vld [vmem:[%s0] sm:$0xff]
    %v22 = vld [vmem:[%s1] sm:$0xff]
    %v23 = vld [vmem:[%s1 + $0x8] sm:$0xff]
    %v24 = vld [vmem:[%s1 + $0x10] sm:$0xff]
    %v25 = vld [vmem:[%s1 + $0x18] sm:$0xff]
    %v26 = vld [vmem:[%s1 + $0x20] sm:$0xff]
    %v27 = vld [vmem:[%s1 + $0x28] sm:$0xff]
    %v28 = vld [vmem:[%s1 + $0x30] sm:$0xff]
    %v29 = vld [vmem:[%s1 + $0x38] sm:$0xff]
    %v30 = vld [vmem:[%s1 + $0x40] sm:$0xff]
    %v31 = vld [vmem:[%s1 + $0x48] sm:$0xff]
    %v32 = vld [vmem:[%s1 + $0x50] sm:$0xff]
    %v33 = vld [vmem:[%s1 + $0x58] sm:$0xff]
    %v34 = vld [vmem:[%s1 + $0x60] sm:$0xff]
    %v35 = vld [vmem:[%s1 + $0x68] sm:$0xff]
    %v36 = vld [vmem:[%s1 + $0x70] sm:$0xff]
    %v37 = vld [vmem:[%s1 + $0x78] sm:$0xff]
    %38 = vmatprep.subr.mxu0 0.0
    %39 = vmatpush1.msra.mxu0 %v37
    %40 = vmatprep.subr.mxu0 0.0
    %41 = vmatpush1.msra.mxu0 %v36
    %42 = vmatprep.subr.mxu0 0.0
    %43 = vmatpush1.msra.mxu0 %v35
    %44 = vmatprep.subr.mxu0 0.0
    %45 = vmatpush1.msra.mxu0 %v34
    %46 = vmatprep.subr.mxu0 0.0
    %47 = vmatpush1.msra.mxu0 %v33
    %48 = vmatprep.subr.mxu0 0.0
    %49 = vmatpush1.msra.mxu0 %v32
    %50 = vmatprep.subr.mxu0 0.0
    %51 = vmatpush1.msra.mxu0 %v31
    %52 = vmatprep.subr.mxu0 0.0
    %53 = vmatpush1.msra.mxu0 %v30
    %54 = vmatprep.subr.mxu0 0.0
    %55 = vmatpush1.msra.mxu0 %v29
    %56 = vmatprep.subr.mxu0 0.0
    %57 = vmatpush1.msra.mxu0 %v28
    %58 = vmatprep.subr.mxu0 0.0
    %59 = vmatpush1.msra.mxu0 %v27
    %60 = vmatprep.subr.mxu0 0.0
    %61 = vmatpush1.msra.mxu0 %v26
    %62 = vmatprep.subr.mxu0 0.0
    %63 = vmatpush1.msra.mxu0 %v25
    %64 = vmatprep.subr.mxu0 0.0
    %65 = vmatpush1.msra.mxu0 %v24
    %66 = vmatprep.subr.mxu0 0.0
    %67 = vmatpush1.msra.mxu0 %v23
    %68 = vmatprep.subr.mxu0 0.0
    %69 = vmatpush1.msra.mxu0 %v22
    %70 = vmatprep.subr.mxu0 0.0
    %71 = vmatpush2.msra.mxu0 0.0
    %72 = vmatprep.subr.mxu0 0.0
    %73 = vmatpush2.msra.mxu0 0.0
    %74 = vmatprep.subr.mxu0 0.0
    %75 = vmatpush2.msra.mxu0 0.0
    %76 = vmatprep.subr.mxu0 0.0
    %77 = vmatpush2.msra.mxu0 0.0
    %78 = vmatprep.subr.mxu0 0.0
    %79 = vmatpush2.msra.mxu0 0.0
    %80 = vmatprep.subr.mxu0 0.0
    %81 = vmatpush2.msra.mxu0 0.0
    %82 = vmatprep.subr.mxu0 0.0
    %83 = vmatpush2.msra.mxu0 0.0
    %84 = vmatprep.subr.mxu0 0.0
    %85 = vmatpush2.msra.mxu0 0.0
    %86 = vmatprep.subr.mxu0 0.0
    %87 = vmatpush2.msra.mxu0 0.0
    %88 = vmatprep.subr.mxu0 0.0
    %89 = vmatpush2.msra.mxu0 0.0
    %90 = vmatprep.subr.mxu0 0.0
    %91 = vmatpush2.msra.mxu0 0.0
    %92 = vmatprep.subr.mxu0 0.0
    %93 = vmatpush2.msra.mxu0 0.0
    %94 = vmatprep.subr.mxu0 0.0
    %95 = vmatpush2.msra.mxu0 0.0
    %96 = vmatprep.subr.mxu0 0.0
    %97 = vmatpush2.msra.mxu0 0.0
    %98 = vmatprep.subr.mxu0 0.0
    %99 = vmatpush2.msra.mxu0 0.0
    %100 = vmatprep.subr.mxu0 0.0
    %101 = vmatpush2.msra.mxu0 0.0
    %102 = vmatprep.mubr.f32.mxu0 0.0
    %103 = vmatmul.mubr.f32.gmra.mxu0 %v21
    %v104 = vpop.f32.mrf.mxu0
    %v105 = vadd.f32 0.0, %v104
    %v106 = vpop.f32.mrf.mxu0
    %107 = vdwg.mxu0
    %v108 = vadd.f32 %v20, %v105
    %109 = vst [vmem:[#allocation2] sm:$0xff] %v108
    // Predicated region
    $region18: #{linear_relu.1} parent=1 // pred_check
      %p110 = pneg %p15
    $region19: #{linear_relu.1} parent=1 // pred_check_branch
      %112 = sbr.rel (%p110) target = $region21
    $region20: #{linear_relu.1} parent=1 // pred_region
      %v113 = vld [vmem:[#allocation2] sm:$0xff]
      %v114 = vld [vmem:[%s2] sm:$0x1]
      %v116 = vlaneseq
      %v117 = vshrl.u32 %v116, 7
      %v118 = vsub.s32 0, %v117
      %v119 = vrot.slane %v114, %v118
      %v121 = vadd.f32 %v113, %v119
      %v122 = vmax.f32 %v121, 0.0
      %123 = vst [vmem:[#allocation2] sm:$0xff] %v122
    $region21: #{linear_relu.1} parent=1 // pred_fallthru
      _
    // Predicated region
    $region22: #{linear_relu.1} parent=1 // pred_check
      _
    $region23: #{linear_relu.1} parent=1 // pred_check_branch
      %125 = sbr.rel (0) target = $region25
    $region24: #{linear_relu.1} parent=1 // pred_region
      %s127 = ssub.s32 128, 128
      %128 = vsyncadd [#allocation3], %s127
      %s130 = sshll.u32 [#allocation2], 4
      %s131 = int_to_ptr.vmem [resolvable:$true] %s130
      %133 = dma.vmem_to_hbm [thread:$0]  %s131, 128, %s3, [#allocation3]
    $region25: #{linear_relu.1} parent=1 // pred_fallthru
      _
    // Predicated region
    $region26: #{linear_relu.1} parent=1 // pred_check
      _
    $region27: #{linear_relu.1} parent=1 // pred_check_branch
      %135 = sbr.rel (0) target = $region29
    $region28: #{linear_relu.1} parent=1 // pred_region
      %136 = dma.done [#allocation3], 128
    $region29: #{linear_relu.1} parent=1 // pred_fallthru
      _
    %137 = vsyncpa [#allocation3], 1

</llo_original>
